<compile_context>
chip_gen: v6e
topology: v6e:2x2x1
jax: 0.10.0
libtpu: 0.0.40
codegen_flags: <defaults>
</compile_context>

<pallas_src>
import functools
import math

import jax
import jax.numpy as jnp
from jax.experimental import pallas as pl
from jax.experimental.pallas import tpu as pltpu


def _round_up(n, k):
    return ((n + k - 1) // k) * k


def _choose_block_m(m):
    """Batch tile: single step for small batches, >=4 pipelined steps otherwise."""
    if m <= 512:
        return m                       # one grid step; block == full dim is always legal
    # Aim for ~4 grid steps (pipeline overlap + v7x 2-TC sharding), cap tile at 4096 rows.
    bm = min(4096, _round_up((m + 3) // 4, 512))
    return min(bm, m)


def mlp_kernel(x_ref, w1_ref, b1_ref, w2_ref, b2_ref, o_ref):
    # Fused f32 -> bf16 cast of the activation tile (VPU; free in the HBM-bound regime).
    x = x_ref[...].astype(w1_ref.dtype)
    # Layer 1 on the MXU (f32 accumulate), bias + ReLU on the VPU in f32.
    h = jnp.dot(x, w1_ref[...], preferred_element_type=jnp.float32)
    h = jnp.maximum(h + b1_ref[...], 0.0)
    # Layer 2: re-feed the MXU in its operand dtype, accumulate f32, bias in f32.
    y = jnp.dot(h.astype(w2_ref.dtype), w2_ref[...],
                preferred_element_type=jnp.float32)
    o_ref[...] = (y + b2_ref[...]).astype(o_ref.dtype)


@functools.partial(jax.jit, static_argnames=("block_m", "compute_dtype", "out_dtype"))
def mlp_forward(x, w1, b1, w2, b2, *, block_m=None, compute_dtype=jnp.bfloat16,
                out_dtype=None):
    m, in_dim = x.shape
    hidden = w1.shape[1]
    out_dim = w2.shape[1]
    out_dtype = x.dtype if out_dtype is None else out_dtype

    # --- Pad the hidden dim (VMEM-only) to 128 lanes; weights/biases are tiny. ---
    hidden_p = _round_up(hidden, 128)
    w1_c = jnp.pad(w1, ((0, 0), (0, hidden_p - hidden))).astype(compute_dtype)
    b1_p = jnp.pad(b1, ((0, 0), (0, hidden_p - hidden)))                 # stays f32
    w2_c = jnp.pad(w2, ((0, hidden_p - hidden), (0, 0))).astype(compute_dtype)
    # b2 stays unpadded f32; output is emitted at its true width (no wrapper slice).

    if block_m is None:
        block_m = _choose_block_m(m)
    else:
        block_m = min(block_m, m)
        if block_m < m:
            block_m = _round_up(block_m, 16)   # sublane-packing-safe tile height

    grid = (pl.cdiv(m, block_m),)

    return pl.pallas_call(
        mlp_kernel,
        out_shape=jax.ShapeDtypeStruct((m, out_dim), out_dtype),
        grid_spec=pltpu.PrefetchScalarGridSpec(
            num_scalar_prefetch=0,
            grid=grid,
            in_specs=[
                pl.BlockSpec((block_m, in_dim), lambda i: (i, 0)),    # x tile (streamed, f32)
                pl.BlockSpec((in_dim, hidden_p), lambda i: (0, 0)),   # W1 (resident, bf16)
                pl.BlockSpec((1, hidden_p), lambda i: (0, 0)),        # b1 (resident, f32)
                pl.BlockSpec((hidden_p, out_dim), lambda i: (0, 0)),  # W2 (resident, bf16)
                pl.BlockSpec((1, out_dim), lambda i: (0, 0)),         # b2 (resident, f32)
            ],
            out_specs=pl.BlockSpec((block_m, out_dim), lambda i: (i, 0)),
        ),
        compiler_params=pltpu.CompilerParams(
            dimension_semantics=("parallel",),
            vmem_limit_bytes=32 * 1024 * 1024,   # actual need < 8 MiB; safe on v7x (64 MiB)
        ),
    )(x, w1_c, b1_p, w2_c, b2)


def init_mlp_params(key, in_dim, hidden, out_dim, dtype=jnp.float32):
    """Deterministic init matching nn.Linear's default U(-1/sqrt(fan_in), 1/sqrt(fan_in))."""
    k1, k2, k3, k4 = jax.random.split(key, 4)
    bound1 = 1.0 / math.sqrt(in_dim)
    bound2 = 1.0 / math.sqrt(hidden)
    w1 = jax.random.uniform(k1, (in_dim, hidden), dtype, -bound1, bound1)
    b1 = jax.random.uniform(k2, (1, hidden), dtype, -bound1, bound1)
    w2 = jax.random.uniform(k3, (hidden, out_dim), dtype, -bound2, bound2)
    b2 = jax.random.uniform(k4, (1, out_dim), dtype, -bound2, bound2)
    return w1, b1, w2, b2


if __name__ == "__main__":
    in_dim, hidden, out_dim = 32, 64, 32
    batch = 16

    key = jax.random.PRNGKey(0)
    kx, kp = jax.random.split(key)
    x = jax.random.normal(kx, (batch, in_dim), jnp.float32)
    w1, b1, w2, b2 = init_mlp_params(kp, in_dim, hidden, out_dim)

    out = mlp_forward(x, w1, b1, w2, b2)
    out = jax.block_until_ready(out)
    assert out.shape == (batch, out_dim)
    assert out.dtype == x.dtype

    # Reference with matching bf16-operand / f32-accumulate precision (tight check).
    xb, w1b, w2b = (a.astype(jnp.bfloat16) for a in (x, w1, w2))
    h_ref = jnp.maximum(
        jnp.dot(xb, w1b, preferred_element_type=jnp.float32) + b1, 0.0)
    ref_bf16 = jnp.dot(h_ref.astype(jnp.bfloat16), w2b,
                       preferred_element_type=jnp.float32) + b2
    assert jnp.allclose(out, ref_bf16, atol=1e-4, rtol=1e-4)

    # Pure-f32 PyTorch-style reference (loose check for the bf16 matmul operands).
    ref_f32 = jnp.maximum(x @ w1 + b1, 0.0) @ w2 + b2
    assert jnp.allclose(out, ref_f32, atol=2e-2, rtol=2e-2)

    print("KERNEL_OK")
</pallas_src>

<mosaic_0001>
module attributes {stable_mosaic.version = 11 : i64} {
  func.func @mlp_kernel(%arg0: i32, %arg1: memref<16x32xf32, #tpu.memory_space<vmem>>, %arg2: memref<32x128xbf16, #tpu.memory_space<vmem>>, %arg3: memref<1x128xf32, #tpu.memory_space<vmem>>, %arg4: memref<128x32xbf16, #tpu.memory_space<vmem>>, %arg5: memref<1x32xf32, #tpu.memory_space<vmem>>, %arg6: memref<16x32xf32, #tpu.memory_space<vmem>>) attributes {dimension_semantics = [#tpu.dimension_semantics<parallel>], iteration_bounds = array<i64: 1>, scalar_prefetch = 0 : i64, scratch_operands = 0 : i64, tpu.core_type = #tpu.core_type<tc>, window_params = [{transform_indices = @transform_0, window_bounds = array<i64: 16, 32>}, {pipeline_mode = #tpu.pipeline_mode<synchronous>, transform_indices = @transform_1, window_bounds = array<i64: 32, 128>}, {pipeline_mode = #tpu.pipeline_mode<synchronous>, transform_indices = @transform_2, window_bounds = array<i64: 1, 128>}, {pipeline_mode = #tpu.pipeline_mode<synchronous>, transform_indices = @transform_3, window_bounds = array<i64: 128, 32>}, {pipeline_mode = #tpu.pipeline_mode<synchronous>, transform_indices = @transform_4, window_bounds = array<i64: 1, 32>}, {transform_indices = @transform_5, window_bounds = array<i64: 16, 32>}]} {
    %c0 = arith.constant 0 : index
    %c0_0 = arith.constant 0 : index
    %0 = vector.load %arg1[%c0, %c0_0] : memref<16x32xf32, #tpu.memory_space<vmem>>, vector<16x32xf32>
    %1 = arith.truncf %0 : vector<16x32xf32> to vector<16x32xbf16>
    %c0_1 = arith.constant 0 : index
    %c0_2 = arith.constant 0 : index
    %2 = vector.load %arg2[%c0_1, %c0_2] : memref<32x128xbf16, #tpu.memory_space<vmem>>, vector<32x128xbf16>
    %cst = arith.constant dense<0.000000e+00> : vector<16x128xf32>
    %3 = tpu.matmul %1, %2, %cst {dimension_numbers = #tpu.dot_dimension_numbers<[1], [0], [0], [1], [0, 0, 1, 1], [], []>} : vector<16x32xbf16>, vector<32x128xbf16>, vector<16x128xf32> -> vector<16x128xf32>
    %c0_3 = arith.constant 0 : index
    %c0_4 = arith.constant 0 : index
    %4 = vector.load %arg3[%c0_3, %c0_4] : memref<1x128xf32, #tpu.memory_space<vmem>>, vector<1x128xf32>
    %5 = vector.broadcast %4 : vector<1x128xf32> to vector<16x128xf32>
    %6 = arith.addf %3, %5 : vector<16x128xf32>
    %cst_5 = arith.constant 0.000000e+00 : f32
    %7 = vector.broadcast %cst_5 : f32 to vector<16x128xf32>
    %8 = arith.maximumf %6, %7 : vector<16x128xf32>
    %9 = arith.truncf %8 : vector<16x128xf32> to vector<16x128xbf16>
    %c0_6 = arith.constant 0 : index
    %c0_7 = arith.constant 0 : index
    %10 = vector.load %arg4[%c0_6, %c0_7] : memref<128x32xbf16, #tpu.memory_space<vmem>>, vector<128x32xbf16>
    %cst_8 = arith.constant dense<0.000000e+00> : vector<16x32xf32>
    %11 = tpu.matmul %9, %10, %cst_8 {dimension_numbers = #tpu.dot_dimension_numbers<[1], [0], [0], [1], [0, 0, 1, 1], [], []>} : vector<16x128xbf16>, vector<128x32xbf16>, vector<16x32xf32> -> vector<16x32xf32>
    %c0_9 = arith.constant 0 : index
    %c0_10 = arith.constant 0 : index
    %12 = vector.load %arg5[%c0_9, %c0_10] : memref<1x32xf32, #tpu.memory_space<vmem>>, vector<1x32xf32>
    %13 = vector.broadcast %12 : vector<1x32xf32> to vector<16x32xf32>
    %14 = arith.addf %11, %13 : vector<16x32xf32>
    %c0_11 = arith.constant 0 : index
    %c0_12 = arith.constant 0 : index
    %15 = vector.load %arg6[%c0_11, %c0_12] : memref<16x32xf32, #tpu.memory_space<vmem>>, vector<16x32xf32>
    tpu.vector_store %arg6[%c0_11, %c0_12], %14 {strides = array<i32>} : memref<16x32xf32, #tpu.memory_space<vmem>>, vector<16x32xf32>,
    return
  }
  func.func @transform_0(%arg0: i32) -> (i32, i32) {
    %c0_i32 = arith.constant 0 : i32
    %c0_i32_0 = arith.constant 0 : i32
    return %arg0, %c0_i32 : i32, i32
  }
  func.func @transform_1(%arg0: i32) -> (i32, i32) {
    %c0_i32 = arith.constant 0 : i32
    %c0_i32_0 = arith.constant 0 : i32
    %c0_i32_1 = arith.constant 0 : i32
    return %c0_i32, %c0_i32_0 : i32, i32
  }
  func.func @transform_2(%arg0: i32) -> (i32, i32) {
    %c0_i32 = arith.constant 0 : i32
    %c0_i32_0 = arith.constant 0 : i32
    %c0_i32_1 = arith.constant 0 : i32
    return %c0_i32, %c0_i32_0 : i32, i32
  }
  func.func @transform_3(%arg0: i32) -> (i32, i32) {
    %c0_i32 = arith.constant 0 : i32
    %c0_i32_0 = arith.constant 0 : i32
    %c0_i32_1 = arith.constant 0 : i32
    return %c0_i32, %c0_i32_0 : i32, i32
  }
  func.func @transform_4(%arg0: i32) -> (i32, i32) {
    %c0_i32 = arith.constant 0 : i32
    %c0_i32_0 = arith.constant 0 : i32
    %c0_i32_1 = arith.constant 0 : i32
    return %c0_i32, %c0_i32_0 : i32, i32
  }
  func.func @transform_5(%arg0: i32) -> (i32, i32) {
    %c0_i32 = arith.constant 0 : i32
    %c0_i32_0 = arith.constant 0 : i32
    return %arg0, %c0_i32 : i32, i32
  }
}

</mosaic_0001>

<llo_original>
// kernel: mlp_forward.1
$region0: #{mlp_forward.1}
  #allocation0 [shape = 'u32[]', space=smem, size = 0x4, offset = 0x4, fixed_abs, tag = 'smem constant byte address 0x4 - core index']
  #allocation1 [shape = 'u32[144,128]{1,0:T(1,128)}', space=vmem, size = 0x12000, scoped, tag = 'internal scratch']
  %s0 = inlined_call_operand.vmem [shape: f32[16,32], index: 0, kind: input, shape index: {}]
  %s1 = inlined_call_operand.vmem [shape: bf16[32,128], index: 1, kind: input, shape index: {}]
  %s2 = inlined_call_operand.vmem [shape: f32[1,128], index: 2, kind: input, shape index: {}]
  %s3 = inlined_call_operand.vmem [shape: bf16[128,32], index: 3, kind: input, shape index: {}]
  %s4 = inlined_call_operand.vmem [shape: f32[1,32], index: 4, kind: input, shape index: {}]
  %s5 = inlined_call_operand.hbm [shape: f32[16,32], index: 5, kind: output, shape index: {}]
  %s6 = sld [smem:[#allocation0]]
  $region30: #{mlp_forward.1} parent=0
    _
  %s8 = ssub.s32 1, %s6
  %s9 = scalar_select 0, %s8, %s6
  $region1: #{mlp_forward.1} parent=0
    #allocation2 [shape = 'u8[8192]{0}', space=vmem, size = 0x2000, scoped, tag = 'output window, operand 0, single buffered']
    #allocation3 [shape = 's32[1]{0}', space=sflag, size = 0x4, scoped, tag = 'scoped memory for mlp_forward.1']
    %10 = vsyncpa [#allocation3], 0
    // Predicated region
    $region2: #{mlp_forward.1} parent=1 // pred_check
      _
    $region3: #{mlp_forward.1} parent=1 // pred_check_branch
      %12 = sbr.rel (0) target = $region5
    $region4: #{mlp_forward.1} parent=1 // pred_region
      _
    $region5: #{mlp_forward.1} parent=1 // pred_fallthru
      _
    // Predicated region
    $region6: #{mlp_forward.1} parent=1 // pred_check
      _
    $region7: #{mlp_forward.1} parent=1 // pred_check_branch
      %14 = sbr.rel (0) target = $region9
    $region8: #{mlp_forward.1} parent=1 // pred_region
      _
    $region9: #{mlp_forward.1} parent=1 // pred_fallthru
      _
    // Predicated region
    $region10: #{mlp_forward.1} parent=1 // pred_check
      _
    $region11: #{mlp_forward.1} parent=1 // pred_check_branch
      %16 = sbr.rel (0) target = $region13
    $region12: #{mlp_forward.1} parent=1 // pred_region
      _
    $region13: #{mlp_forward.1} parent=1 // pred_fallthru
      _
    // Predicated region
    $region14: #{mlp_forward.1} parent=1 // pred_check
      _
    $region15: #{mlp_forward.1} parent=1 // pred_check_branch
      %18 = sbr.rel (0) target = $region17
    $region16: #{mlp_forward.1} parent=1 // pred_region
      _
    $region17: #{mlp_forward.1} parent=1 // pred_fallthru
      _
    // Predicated region
    $region18: #{mlp_forward.1} parent=1 // pred_check
      _
    $region19: #{mlp_forward.1} parent=1 // pred_check_branch
      %20 = sbr.rel (0) target = $region21
    $region20: #{mlp_forward.1} parent=1 // pred_region
      _
    $region21: #{mlp_forward.1} parent=1 // pred_fallthru
      _
    %v22 = vld [vmem:[%s0] sm:$0xff]
    %v23 = vld [vmem:[%s0 + $0x8] sm:$0xff]
    %v24 = vpack.c.bf16 %v23, %v22
    %v25 = vld [vmem:[%s1] sm:$0xf]
    %v26 = vld [vmem:[%s1 + $0x4] sm:$0xf]
    %v27 = vld [vmem:[%s1 + $0x8] sm:$0xf]
    %v28 = vld [vmem:[%s1 + $0xc] sm:$0xf]
    %v29 = vld [vmem:[%s2] sm:$0x1]
    %v31 = vlaneseq
    %v32 = vshrl.u32 %v31, 7
    %v33 = vsub.s32 0, %v32
    %v34 = vrot.slane %v29, %v33
    %v40 = vunpack.c.l.b16 %v25
    %v41 = vunpack.c.l.b16 %v26
    %v42 = vunpack.c.l.b16 %v27
    %v43 = vunpack.c.l.b16 %v28
    %v44 = vpack.c.b16 %v41, %v40
    %v45 = vpack.c.b16 %v43, %v42
    %vm48 = vcmask 261120
    %v50 = vsel %vm48, %v24, 0
    %52 = vmatprep.subr.bf16.mxu0 0
    %53 = vmatpush1.bf16.msra.mxu0 0
    %54 = vmatprep.subr.bf16.mxu0 0
    %55 = vmatpush1.bf16.msra.mxu0 0
    %56 = vmatprep.subr.bf16.mxu0 0
    %57 = vmatpush1.bf16.msra.mxu0 0
    %58 = vmatprep.subr.bf16.mxu0 0
    %59 = vmatpush1.bf16.msra.mxu0 0
    %60 = vmatprep.subr.bf16.mxu0 0
    %61 = vmatpush1.bf16.msra.mxu0 0
    %62 = vmatprep.subr.bf16.mxu0 0
    %63 = vmatpush1.bf16.msra.mxu0 0
    %64 = vmatprep.subr.bf16.mxu0 0
    %65 = vmatpush1.bf16.msra.mxu0 %v45
    %66 = vmatprep.subr.bf16.mxu0 0
    %67 = vmatpush1.bf16.msra.mxu0 %v44
    %68 = vmatprep.subr.bf16.mxu0 0
    %69 = vmatpush2.bf16.msra.mxu0 0
    %70 = vmatprep.subr.bf16.mxu0 0
    %71 = vmatpush2.bf16.msra.mxu0 0
    %72 = vmatprep.subr.bf16.mxu0 0
    %73 = vmatpush2.bf16.msra.mxu0 0
    %74 = vmatprep.subr.bf16.mxu0 0
    %75 = vmatpush2.bf16.msra.mxu0 0
    %76 = vmatprep.subr.bf16.mxu0 0
    %77 = vmatpush2.bf16.msra.mxu0 0
    %78 = vmatprep.subr.bf16.mxu0 0
    %79 = vmatpush2.bf16.msra.mxu0 0
    %80 = vmatprep.subr.bf16.mxu0 0
    %81 = vmatpush2.bf16.msra.mxu0 0
    %82 = vmatprep.subr.bf16.mxu0 0
    %83 = vmatpush2.bf16.msra.mxu0 0
    %84 = vmatprep.mubr.bf16.mxu0 0
    %85 = vmatmul.mubr.bf16.gmra.mxu0 %v50
    %v86 = vpop.f32.mrf.mxu0
    %v87 = vadd.f32 %v34, %v86
    %v88 = vpop.f32.mrf.mxu0
    %v89 = vpop.f32.mrf.mxu0
    %v90 = vadd.f32 %v34, %v89
    %v91 = vpop.f32.mrf.mxu0
    %92 = vdwg.mxu0
    %v93 = vmax.f32 %v87, 0.0
    %v94 = vmax.f32 %v90, 0.0
    %v95 = vpack.c.bf16 %v94, %v93
    %v96 = vld [vmem:[%s3] sm:$0xf]
    %v97 = vld [vmem:[%s3 + $0x4] sm:$0xf]
    %v98 = vld [vmem:[%s3 + $0x8] sm:$0xf]
    %v99 = vld [vmem:[%s3 + $0xc] sm:$0xf]
    %v100 = vld [vmem:[%s3 + $0x10] sm:$0xf]
    %v101 = vld [vmem:[%s3 + $0x14] sm:$0xf]
    %v102 = vld [vmem:[%s3 + $0x18] sm:$0xf]
    %v103 = vld [vmem:[%s3 + $0x1c] sm:$0xf]
    %v104 = vld [vmem:[%s3 + $0x20] sm:$0xf]
    %v105 = vld [vmem:[%s3 + $0x24] sm:$0xf]
    %v106 = vld [vmem:[%s3 + $0x28] sm:$0xf]
    %v107 = vld [vmem:[%s3 + $0x2c] sm:$0xf]
    %v108 = vld [vmem:[%s3 + $0x30] sm:$0xf]
    %v109 = vld [vmem:[%s3 + $0x34] sm:$0xf]
    %v110 = vld [vmem:[%s3 + $0x38] sm:$0xf]
    %v111 = vld [vmem:[%s3 + $0x3c] sm:$0xf]
    %v112 = vld [vmem:[%s4] sm:$0x1]
    %v114 = vlaneseq
    %v115 = vshrl.u32 %v114, 7
    %v116 = vsub.s32 0, %v115
    %v117 = vrot.slane %v112, %v116
    %v135 = vunpack.c.l.b16 %v96
    %v136 = vunpack.c.l.b16 %v97
    %v137 = vunpack.c.l.b16 %v98
    %v138 = vunpack.c.l.b16 %v99
    %v139 = vunpack.c.l.b16 %v100
    %v140 = vunpack.c.l.b16 %v101
    %v141 = vunpack.c.l.b16 %v102
    %v142 = vunpack.c.l.b16 %v103
    %v143 = vunpack.c.l.b16 %v104
    %v144 = vunpack.c.l.b16 %v105
    %v145 = vunpack.c.l.b16 %v106
    %v146 = vunpack.c.l.b16 %v107
    %v147 = vunpack.c.l.b16 %v108
    %v148 = vunpack.c.l.b16 %v109
    %v149 = vunpack.c.l.b16 %v110
    %v150 = vunpack.c.l.b16 %v111
    %v151 = vpack.c.b16 %v136, %v135
    %v152 = vpack.c.b16 %v138, %v137
    %v153 = vpack.c.b16 %v140, %v139
    %v154 = vpack.c.b16 %v142, %v141
    %v155 = vpack.c.b16 %v144, %v143
    %v156 = vpack.c.b16 %v146, %v145
    %v157 = vpack.c.b16 %v148, %v147
    %v158 = vpack.c.b16 %v150, %v149
    %167 = vmatprep.subr.bf16.mxu0 0
    %168 = vmatpush1.bf16.msra.mxu0 %v158
    %169 = vmatprep.subr.bf16.mxu0 0
    %170 = vmatpush1.bf16.msra.mxu0 %v157
    %171 = vmatprep.subr.bf16.mxu0 0
    %172 = vmatpush1.bf16.msra.mxu0 %v156
    %173 = vmatprep.subr.bf16.mxu0 0
    %174 = vmatpush1.bf16.msra.mxu0 %v155
    %175 = vmatprep.subr.bf16.mxu0 0
    %176 = vmatpush1.bf16.msra.mxu0 %v154
    %177 = vmatprep.subr.bf16.mxu0 0
    %178 = vmatpush1.bf16.msra.mxu0 %v153
    %179 = vmatprep.subr.bf16.mxu0 0
    %180 = vmatpush1.bf16.msra.mxu0 %v152
    %181 = vmatprep.subr.bf16.mxu0 0
    %182 = vmatpush1.bf16.msra.mxu0 %v151
    %183 = vmatprep.subr.bf16.mxu0 0
    %184 = vmatpush2.bf16.msra.mxu0 0
    %185 = vmatprep.subr.bf16.mxu0 0
    %186 = vmatpush2.bf16.msra.mxu0 0
    %187 = vmatprep.subr.bf16.mxu0 0
    %188 = vmatpush2.bf16.msra.mxu0 0
    %189 = vmatprep.subr.bf16.mxu0 0
    %190 = vmatpush2.bf16.msra.mxu0 0
    %191 = vmatprep.subr.bf16.mxu0 0
    %192 = vmatpush2.bf16.msra.mxu0 0
    %193 = vmatprep.subr.bf16.mxu0 0
    %194 = vmatpush2.bf16.msra.mxu0 0
    %195 = vmatprep.subr.bf16.mxu0 0
    %196 = vmatpush2.bf16.msra.mxu0 0
    %197 = vmatprep.subr.bf16.mxu0 0
    %198 = vmatpush2.bf16.msra.mxu0 0
    %199 = vmatprep.mubr.bf16.mxu0 0
    %200 = vmatmul.mubr.bf16.gmra.mxu0 %v95
    %v201 = vpop.f32.mrf.mxu0
    %v202 = vadd.f32 %v117, %v201
    %v203 = vpop.f32.mrf.mxu0
    %v204 = vpop.f32.mrf.mxu0
    %v205 = vadd.f32 %v117, %v204
    %v206 = vpop.f32.mrf.mxu0
    %207 = vdwg.mxu0
    %208 = vst.msk [vmem:[#allocation2] sm:$0xff] %vm48, %v202
    %209 = vst.msk [vmem:[#allocation2 + $0x8] sm:$0xff] %vm48, %v205
    // Predicated region
    $region22: #{mlp_forward.1} parent=1 // pred_check
      _
    $region23: #{mlp_forward.1} parent=1 // pred_check_branch
      %211 = sbr.rel (0) target = $region25
    $region24: #{mlp_forward.1} parent=1 // pred_region
      %s213 = ssub.s32 256, 256
      %214 = vsyncadd [#allocation3], %s213
      %s215 = sshll.u32 [#allocation2], 4
      %s216 = int_to_ptr.vmem [resolvable:$true] %s215
      %221 = dma.vmem_to_hbm [thread:$0]  %s216, 256, %s5, [#allocation3], 128, 128, 8
    $region25: #{mlp_forward.1} parent=1 // pred_fallthru
      _
    // Predicated region
    $region26: #{mlp_forward.1} parent=1 // pred_check
      _
    $region27: #{mlp_forward.1} parent=1 // pred_check_branch
      %223 = sbr.rel (0) target = $region29
    $region28: #{mlp_forward.1} parent=1 // pred_region
      %224 = dma.done [#allocation3], 256
    $region29: #{mlp_forward.1} parent=1 // pred_fallthru
      _
    %225 = vsyncpa [#allocation3], 1

</llo_original>
